<compile_context>
chip_gen: v7x
topology: tpu7x:2x2x1
jax: 0.10.0
libtpu: 0.0.40
codegen_flags: <defaults>
</compile_context>

<pallas_src>
import functools
import math

import jax
import jax.numpy as jnp
from jax import lax
from jax.experimental import pallas as pl
from jax.experimental.pallas import tpu as pltpu

_LANE = 128


def _round_up(x, m):
    return ((x + m - 1) // m) * m


def _pick_tile(n_lanes, n_classes, max_tile_lanes):
    # Target ~2 MiB of f32 per (C, TILE) working block: big enough to amortise
    # the fixed per-grid-step cost and run near the HBM roofline, small enough
    # that double-buffered inputs + f32 intermediates stay well inside VMEM
    # (v7x only has 64 MiB per TensorCore).
    target_f32_bytes = 2 * 1024 * 1024
    t = target_f32_bytes // (n_classes * 4)
    t = (t // _LANE) * _LANE
    t = max(_LANE, min(t, max_tile_lanes))
    t = min(t, _round_up(n_lanes, _LANE))
    return int(t)


def _focal_pow(x, gamma):
    # x = 1 - pt >= 0 always. Integer gamma -> pure VPU; otherwise EUP exp/log
    # (x == 0 -> log=-inf -> exp=0, correct limit for gamma > 0).
    g = float(gamma)
    if g.is_integer() and 0 <= int(g) <= 32:
        return lax.integer_pow(x, int(g))
    return jnp.exp(g * jnp.log(x))


def _nfl_kernel(logits_ref, labels_ref, alpha_ref, num_ref, den_ref, *,
                gamma, n_valid, has_alpha, needs_mask):
    """One (C, TILE) tile: emit this tile's partial (num, den).

    logits_ref : (C, TILE)  model dtype   classes on sublanes, pixels on lanes
    labels_ref : (1, TILE)  int8/16/32    class id per pixel (tail = garbage)
    alpha_ref  : (C, 1)     float32       per-class alpha (ones if alpha=None)
    num_ref    : (1, 1)     float32       sum( (1-pt)^g * alpha_t * logpt )
    den_ref    : (1, 1)     float32       sum( (1-pt)^g )
    """
    logits = logits_ref[...].astype(jnp.float32)                 # (C, T)
    C, T = logits.shape

    valid = None
    if needs_mask:
        lane = lax.broadcasted_iota(jnp.int32, (1, T), 1)
        valid = (pl.program_id(1) * T + lane) < n_valid          # (1, T) bool
        # Zero garbage tail lanes BEFORE any exp/log so NaN/Inf can't leak in.
        logits = jnp.where(valid, logits, 0.0)

    # log-softmax over the class (sublane) axis.
    m = jnp.max(logits, axis=0, keepdims=True)                   # (1, T)
    shifted = logits - m
    lse = jnp.log(jnp.sum(jnp.exp(shifted), axis=0, keepdims=True))  # (1, T)

    labels = labels_ref[...].astype(jnp.int32)                   # (1, T)
    cls = lax.broadcasted_iota(jnp.int32, (C, T), 0)             # (C, T)
    onehot = cls == labels                                       # (C, T) bool

    true_shifted = jnp.sum(jnp.where(onehot, shifted, 0.0),
                           axis=0, keepdims=True)                # (1, T)
    logpt = true_shifted - lse                                   # (1, T), <= 0
    pt = jnp.exp(logpt)

    w = _focal_pow(1.0 - pt, gamma)                              # (1, T)
    if needs_mask:
        w = jnp.where(valid, w, 0.0)

    if has_alpha:
        at = jnp.sum(jnp.where(onehot, alpha_ref[...], 0.0),
                     axis=0, keepdims=True)                      # (1, T)
        num = w * at * logpt
    else:
        num = w * logpt

    num_ref[...] = jnp.sum(num, keepdims=True)
    den_ref[...] = jnp.sum(w, keepdims=True)


def normalised_focal_loss(logits, target, *, gamma=2.0, alpha=None,
                          size_average=True, max_tile_lanes=128 * 1024):
    """Pallas/JAX equivalent of NormalisedFocalLoss(gamma, alpha, size_average)."""
    if logits.ndim > 2:
        B, C = int(logits.shape[0]), int(logits.shape[1])
        N = int(math.prod(logits.shape[2:]))
        lg = logits.reshape(B, C, N)              # contiguous view, no HBM copy
        tg = target.reshape(B, N)
    else:
        # [N, C] path: classes must land on sublanes -> one relayout copy.
        # TODO(synk): add a classes-on-lanes kernel variant to avoid this copy.
        N, C = int(logits.shape[0]), int(logits.shape[1])
        lg = jnp.transpose(logits, (1, 0))[None]  # [1, C, N]
        tg = target.reshape(1, N)
        B = 1

    # Per-class alpha weights; ones == no alpha weighting (same math as torch).
    if alpha is None:
        alpha_arr = jnp.ones((C,), jnp.float32)
    elif isinstance(alpha, (float, int)):
        alpha_arr = jnp.array([float(alpha), 1.0 - float(alpha)], jnp.float32)
    else:
        alpha_arr = jnp.asarray(alpha, jnp.float32).reshape(-1)
    assert alpha_arr.shape[0] == C, (
        f"alpha must have one entry per class (got {alpha_arr.shape[0]}, C={C})")
    alpha_arr = alpha_arr.reshape(C, 1)

    # Narrow, lane-dense label stream; widened to int32 in-kernel.
    if C <= 127:
        label_dtype = jnp.int8
    elif C <= 32767:
        label_dtype = jnp.int16
    else:
        label_dtype = jnp.int32
    tg = tg.reshape(B, 1, N).astype(label_dtype)

    TILE = _pick_tile(N, C, int(max_tile_lanes))
    n_tiles = -(-N // TILE)
    grid = (B, n_tiles)

    n_total = B * N
    scale = (1.0 / n_total) if size_average else 1.0

    kernel = functools.partial(
        _nfl_kernel,
        gamma=float(gamma),
        n_valid=N,
        has_alpha=(alpha is not None),
        needs_mask=(N % TILE != 0),
    )

    num_parts, den_parts = pl.pallas_call(
        kernel,
        out_shape=(jax.ShapeDtypeStruct((B, n_tiles, 1, 1), jnp.float32),
                   jax.ShapeDtypeStruct((B, n_tiles, 1, 1), jnp.float32)),
        grid=grid,
        in_specs=[
            pl.BlockSpec((None, C, TILE), lambda b, t: (b, 0, t)),   # logits tile
            pl.BlockSpec((None, 1, TILE), lambda b, t: (b, 0, t)),   # labels tile
            pl.BlockSpec((C, 1), lambda b, t: (0, 0)),               # alpha (resident)
        ],
        out_specs=(
            pl.BlockSpec((None, None, 1, 1), lambda b, t: (b, t, 0, 0)),
            pl.BlockSpec((None, None, 1, 1), lambda b, t: (b, t, 0, 0)),
        ),
        compiler_params=pltpu.CompilerParams(
            dimension_semantics=("parallel", "parallel"),
            vmem_limit_bytes=48 * 1024 * 1024),
    )(lg, tg, alpha_arr)

    # Tiny final reduction over B * n_tiles partials in plain JAX.
    num = jnp.sum(num_parts)
    den = jnp.sum(den_parts)
    return (-(num / den) * scale).astype(jnp.float32)


def _reference(logits, target, *, gamma=2.0, alpha=None, size_average=True):
    """Pure-JAX mirror of the PyTorch forward."""
    if logits.ndim > 2:
        B, C = logits.shape[0], logits.shape[1]
        x = logits.reshape(B, C, -1).transpose(0, 2, 1).reshape(-1, C)
    else:
        x = logits
        C = logits.shape[1]
    t = target.reshape(-1).astype(jnp.int32)
    logp = jax.nn.log_softmax(x.astype(jnp.float32), axis=1)
    logpt = jnp.take_along_axis(logp, t[:, None], axis=1)[:, 0]
    pt = jnp.exp(logpt)
    if alpha is not None:
        if isinstance(alpha, (float, int)):
            a = jnp.array([float(alpha), 1.0 - float(alpha)], jnp.float32)
        else:
            a = jnp.asarray(alpha, jnp.float32)
        logpt = logpt * a[t]
    w = (1.0 - pt) ** gamma
    loss = -w * logpt
    loss = loss / jnp.sum(w)
    return jnp.mean(loss) if size_average else jnp.sum(loss)


if __name__ == "__main__":
    key = jax.random.PRNGKey(0)

    # Config A: aligned spatial dims, per-class alpha, size_average=True (mean).
    B, C, H, W = 2, 4, 16, 16
    k1, k2 = jax.random.split(key)
    logits_a = jax.random.normal(k1, (B, C, H, W), dtype=jnp.float32)
    target_a = jax.random.randint(k2, (B, H, W), 0, C, dtype=jnp.int32)
    alpha_a = [0.1, 0.2, 0.3, 0.4]
    out_a = normalised_focal_loss(logits_a, target_a, gamma=2.0,
                                  alpha=alpha_a, size_average=True)
    jax.block_until_ready(out_a)
    ref_a = _reference(logits_a, target_a, gamma=2.0, alpha=alpha_a,
                       size_average=True)
    assert jnp.allclose(out_a, ref_a, rtol=1e-4, atol=1e-5), (out_a, ref_a)

    # Config B: unaligned spatial dims (exercises in-kernel tail masking with
    # NO logits padding), no alpha, non-integer gamma (EUP exp/log path), sum.
    B2, C2, H2, W2 = 2, 4, 10, 10
    k3, k4 = jax.random.split(k2)
    logits_b = jax.random.normal(k3, (B2, C2, H2, W2), dtype=jnp.float32)
    target_b = jax.random.randint(k4, (B2, H2, W2), 0, C2, dtype=jnp.int32)
    out_b = normalised_focal_loss(logits_b, target_b, gamma=2.5,
                                  alpha=None, size_average=False)
    jax.block_until_ready(out_b)
    ref_b = _reference(logits_b, target_b, gamma=2.5, alpha=None,
                       size_average=False)
    assert jnp.allclose(out_b, ref_b, rtol=1e-4, atol=1e-5), (out_b, ref_b)

    # Config C: odd class count, forced tiny tile -> multi-tile parallel grid
    # with a partial final tile, integer gamma != 2, per-class alpha.
    B3, C3, H3, W3 = 1, 3, 20, 20
    k5, k6 = jax.random.split(k4)
    logits_c = jax.random.normal(k5, (B3, C3, H3, W3), dtype=jnp.float32)
    target_c = jax.random.randint(k6, (B3, H3, W3), 0, C3, dtype=jnp.int32)
    alpha_c = [0.2, 0.3, 0.5]
    out_c = normalised_focal_loss(logits_c, target_c, gamma=3.0,
                                  alpha=alpha_c, size_average=True,
                                  max_tile_lanes=128)
    jax.block_until_ready(out_c)
    ref_c = _reference(logits_c, target_c, gamma=3.0, alpha=alpha_c,
                       size_average=True)
    assert jnp.allclose(out_c, ref_c, rtol=1e-4, atol=1e-5), (out_c, ref_c)

    print("KERNEL_OK")
</pallas_src>

<mosaic_0001>
module attributes {stable_mosaic.version = 11 : i64} {
  func.func @_nfl_kernel(%arg0: i32, %arg1: i32, %arg2: memref<1x4x256xf32, #tpu.memory_space<vmem>>, %arg3: memref<1x1x256xi8, #tpu.memory_space<vmem>>, %arg4: memref<4x1xf32, #tpu.memory_space<vmem>>, %arg5: memref<1x1x1x1xf32, #tpu.memory_space<vmem>>, %arg6: memref<1x1x1x1xf32, #tpu.memory_space<vmem>>) attributes {dimension_semantics = [#tpu.dimension_semantics<parallel>, #tpu.dimension_semantics<parallel>], iteration_bounds = array<i64: 2, 1>, scalar_prefetch = 0 : i64, scratch_operands = 0 : i64, tpu.core_type = #tpu.core_type<tc>, window_params = [{transform_indices = @transform_0, window_bounds = array<i64: 1, 4, 256>}, {transform_indices = @transform_1, window_bounds = array<i64: 1, 1, 256>}, {pipeline_mode = #tpu.pipeline_mode<synchronous>, transform_indices = @transform_2, window_bounds = array<i64: 4, 1>}, {transform_indices = @transform_3, window_bounds = array<i64: 1, 1, 1, 1>}, {transform_indices = @transform_4, window_bounds = array<i64: 1, 1, 1, 1>}]} {
    %c0 = arith.constant 0 : index
    %c0_0 = arith.constant 0 : index
    %c0_1 = arith.constant 0 : index
    %0 = vector.load %arg2[%c0, %c0_0, %c0_1] : memref<1x4x256xf32, #tpu.memory_space<vmem>>, vector<1x4x256xf32>
    %1 = vector.shape_cast %0 : vector<1x4x256xf32> to vector<4x256xf32>
    %cst = arith.constant dense<0xFF800000> : vector<256xf32>
    %2 = vector.multi_reduction <maximumf>, %1, %cst [0] : vector<4x256xf32> to vector<256xf32>
    %3 = vector.shape_cast %2 : vector<256xf32> to vector<1x256xf32>
    %4 = vector.broadcast %3 : vector<1x256xf32> to vector<4x256xf32>
    %5 = arith.subf %1, %4 : vector<4x256xf32>
    %6 = math.exp %5 : vector<4x256xf32>
    %cst_2 = arith.constant dense<0.000000e+00> : vector<256xf32>
    %7 = vector.multi_reduction <add>, %6, %cst_2 [0] : vector<4x256xf32> to vector<256xf32>
    %8 = vector.shape_cast %7 : vector<256xf32> to vector<1x256xf32>
    %9 = math.log %8 : vector<1x256xf32>
    %c0_3 = arith.constant 0 : index
    %c0_4 = arith.constant 0 : index
    %c0_5 = arith.constant 0 : index
    %10 = vector.load %arg3[%c0_3, %c0_4, %c0_5] : memref<1x1x256xi8, #tpu.memory_space<vmem>>, vector<1x1x256xi8>
    %11 = vector.shape_cast %10 : vector<1x1x256xi8> to vector<1x256xi8>
    %12 = arith.extsi %11 : vector<1x256xi8> to vector<1x256xi32>
    %13 = tpu.iota {dimensions = array<i32: 0>} : vector<4x256xi32>
    %14 = vector.broadcast %12 : vector<1x256xi32> to vector<4x256xi32>
    %15 = arith.cmpi eq, %13, %14 : vector<4x256xi32>
    %cst_6 = arith.constant 0.000000e+00 : f32
    %16 = vector.broadcast %cst_6 : f32 to vector<4x256xf32>
    %17 = arith.select %15, %5, %16 : vector<4x256xi1>, vector<4x256xf32>
    %cst_7 = arith.constant dense<0.000000e+00> : vector<256xf32>
    %18 = vector.multi_reduction <add>, %17, %cst_7 [0] : vector<4x256xf32> to vector<256xf32>
    %19 = vector.shape_cast %18 : vector<256xf32> to vector<1x256xf32>
    %20 = arith.subf %19, %9 : vector<1x256xf32>
    %21 = math.exp %20 : vector<1x256xf32>
    %cst_8 = arith.constant 1.000000e+00 : f32
    %22 = vector.broadcast %cst_8 : f32 to vector<1x256xf32>
    %23 = arith.subf %22, %21 : vector<1x256xf32>
    %24 = arith.mulf %23, %23 : vector<1x256xf32>
    %c0_9 = arith.constant 0 : index
    %c0_10 = arith.constant 0 : index
    %25 = vector.load %arg4[%c0_9, %c0_10] : memref<4x1xf32, #tpu.memory_space<vmem>>, vector<4x1xf32>
    %cst_11 = arith.constant 0.000000e+00 : f32
    %26 = vector.shape_cast %25 : vector<4x1xf32> to vector<4x1xf32>
    %27 = vector.broadcast %26 : vector<4x1xf32> to vector<4x256xf32>
    %28 = vector.broadcast %cst_11 : f32 to vector<4x256xf32>
    %29 = arith.select %15, %27, %28 : vector<4x256xi1>, vector<4x256xf32>
    %cst_12 = arith.constant dense<0.000000e+00> : vector<256xf32>
    %30 = vector.multi_reduction <add>, %29, %cst_12 [0] : vector<4x256xf32> to vector<256xf32>
    %31 = vector.shape_cast %30 : vector<256xf32> to vector<1x256xf32>
    %32 = arith.mulf %24, %31 : vector<1x256xf32>
    %33 = arith.mulf %32, %20 : vector<1x256xf32>
    %34 = vector.shape_cast %33 : vector<1x256xf32> to vector<1x1x256xf32>
    %cst_13 = arith.constant dense<0.000000e+00> : vector<1xf32>
    %35 = vector.multi_reduction <add>, %34, %cst_13 [1, 2] : vector<1x1x256xf32> to vector<1xf32>
    %36 = vector.shape_cast %35 : vector<1xf32> to vector<1x1x1xf32>
    %37 = vector.extract %36[0, 0, 0] : f32 from vector<1x1x1xf32>
    %38 = vector.broadcast %37 : f32 to vector<1x1xf32>
    %c0_14 = arith.constant 0 : index
    %c0_15 = arith.constant 0 : index
    %c0_16 = arith.constant 0 : index
    %c0_17 = arith.constant 0 : index
    %39 = vector.load %arg5[%c0_14, %c0_15, %c0_16, %c0_17] : memref<1x1x1x1xf32, #tpu.memory_space<vmem>>, vector<1x1x1x1xf32>
    %40 = vector.shape_cast %39 : vector<1x1x1x1xf32> to vector<1x1xf32>
    %41 = vector.shape_cast %38 : vector<1x1xf32> to vector<1x1x1x1xf32>
    tpu.vector_store %arg5[%c0_14, %c0_15, %c0_16, %c0_17], %41 {strides = array<i32>} : memref<1x1x1x1xf32, #tpu.memory_space<vmem>>, vector<1x1x1x1xf32>,
    %42 = vector.shape_cast %24 : vector<1x256xf32> to vector<1x1x256xf32>
    %cst_18 = arith.constant dense<0.000000e+00> : vector<1xf32>
    %43 = vector.multi_reduction <add>, %42, %cst_18 [1, 2] : vector<1x1x256xf32> to vector<1xf32>
    %44 = vector.shape_cast %43 : vector<1xf32> to vector<1x1x1xf32>
    %45 = vector.extract %44[0, 0, 0] : f32 from vector<1x1x1xf32>
    %46 = vector.broadcast %45 : f32 to vector<1x1xf32>
    %c0_19 = arith.constant 0 : index
    %c0_20 = arith.constant 0 : index
    %c0_21 = arith.constant 0 : index
    %c0_22 = arith.constant 0 : index
    %47 = vector.load %arg6[%c0_19, %c0_20, %c0_21, %c0_22] : memref<1x1x1x1xf32, #tpu.memory_space<vmem>>, vector<1x1x1x1xf32>
    %48 = vector.shape_cast %47 : vector<1x1x1x1xf32> to vector<1x1xf32>
    %49 = vector.shape_cast %46 : vector<1x1xf32> to vector<1x1x1x1xf32>
    tpu.vector_store %arg6[%c0_19, %c0_20, %c0_21, %c0_22], %49 {strides = array<i32>} : memref<1x1x1x1xf32, #tpu.memory_space<vmem>>, vector<1x1x1x1xf32>,
    return
  }
  func.func @transform_0(%arg0: i32, %arg1: i32) -> (i32, i32, i32) {
    %c0_i32 = arith.constant 0 : i32
    %c0_i32_0 = arith.constant 0 : i32
    return %arg0, %c0_i32, %arg1 : i32, i32, i32
  }
  func.func @transform_1(%arg0: i32, %arg1: i32) -> (i32, i32, i32) {
    %c0_i32 = arith.constant 0 : i32
    %c0_i32_0 = arith.constant 0 : i32
    return %arg0, %c0_i32, %arg1 : i32, i32, i32
  }
  func.func @transform_2(%arg0: i32, %arg1: i32) -> (i32, i32) {
    %c0_i32 = arith.constant 0 : i32
    %c0_i32_0 = arith.constant 0 : i32
    %c0_i32_1 = arith.constant 0 : i32
    return %c0_i32, %c0_i32_0 : i32, i32
  }
  func.func @transform_3(%arg0: i32, %arg1: i32) -> (i32, i32, i32, i32) {
    %c0_i32 = arith.constant 0 : i32
    %c0_i32_0 = arith.constant 0 : i32
    %c0_i32_1 = arith.constant 0 : i32
    return %arg0, %arg1, %c0_i32, %c0_i32_0 : i32, i32, i32, i32
  }
  func.func @transform_4(%arg0: i32, %arg1: i32) -> (i32, i32, i32, i32) {
    %c0_i32 = arith.constant 0 : i32
    %c0_i32_0 = arith.constant 0 : i32
    %c0_i32_1 = arith.constant 0 : i32
    return %arg0, %arg1, %c0_i32, %c0_i32_0 : i32, i32, i32, i32
  }
}

</mosaic_0001>

<llo_original>
// kernel: tpu_custom_call.1
$region0: #{tpu_custom_call.1}
  #allocation0 [shape = 'u32[]', space=smem, size = 0x4, offset = 0x4, fixed_abs, tag = 'smem constant byte address 0x4 - core index']
  #allocation1 [shape = 'u32[144,128]{1,0:T(1,128)}', space=vmem, size = 0x12000, scoped, tag = 'internal scratch']
  %s0 = inlined_call_operand.hbm [shape: f32[2,4,256], index: 0, kind: input, shape index: {}]
  %s1 = inlined_call_operand.vmem [shape: s8[2,1,256], index: 1, kind: input, shape index: {}]
  %s2 = inlined_call_operand.vmem [shape: f32[4,1], index: 2, kind: input, shape index: {}]
  %s3 = inlined_call_operand.vmem [shape: f32[2,1,1,1], index: 3, kind: output, shape index: {0}]
  %s4 = inlined_call_operand.vmem [shape: f32[2,1,1,1], index: 4, kind: output, shape index: {1}]
  %5 = xla_tuple %s3, %s4
  %s6 = sld [smem:[#allocation0]]
  $region57: #{tpu_custom_call.1} parent=0
    _
  %s8 = ssub.s32 1, %s6
  %s9 = scalar_select 0, %s8, %s6
  $region1: #{tpu_custom_call.1} parent=0
    #allocation2 [shape = 'u8[8192]{0}', space=vmem, size = 0x2000, scoped, tag = 'input window, operand 0']
    #allocation3 [shape = 's32[2]{0}', space=sflag, size = 0x8, scoped, tag = 'scoped memory for tpu_custom_call.1']
    %10 = vsyncpa [#allocation3], 0
    %s11 = scalar_lea.sflag [#allocation3], 1
    %12 = vsyncpa %s11, 0
    loop: start=0, step=1, limit=4
    $region2: #{tpu_custom_call.1} parent=1 // loop_pre_header
      _
    $region3: #{tpu_custom_call.1} parent=1 // loop_header
      %s14 = sphi 0, %s18
      %p15 = scmp.ge.s32.totalorder %s14, 4
      %s21 = sphi 0, %s33
      %s22 = sphi 0, %s29
      %s23 = sphi 0, %s21
      %s24 = sphi 0, %s22
      %s25 = sphi 0, %s23
      %s26 = sphi 0, %s24
      %s38 = sphi 0, %s40
      %s41 = sphi 0, %s38
      %s42 = sphi 0, %s41
      %s58 = sphi 0, %s42
      %s66 = sphi 0, %s68
      %s69 = sphi 0, %s66
      %s70 = sphi 0, %s69
      %s86 = sphi 0, %s70
      %s90 = sphi 0, %s90
      %s92 = sphi 0, %s90
      %s93 = sphi 0, %s92
      %s107 = sphi 0, %s93
      %s115 = sphi 0, %s117
      %s118 = sphi 0, %s115
      %s119 = sphi 0, %s118
      %s135 = sphi 0, %s119
      %s143 = sphi 0, %s145
      %s146 = sphi 0, %s143
      %s147 = sphi 0, %s146
      %s163 = sphi 0, %s147
    $region4: #{tpu_custom_call.1} parent=1 // loop_header_branch
      %17 = sbr.rel (%p15) target = $region8
    $region5: #{tpu_custom_call.1} parent=1 // loop_body
      %s19 = ssub.s32 %s14, 1
      %s20 = ssub.s32 %s14, 2
      %s27 = sadd.s32 1, %s22
      %p28 = scmp.ge.s32.totalorder %s27, 1
      %s29 = scalar_select %p28, 0, %s27
      %s30 = sadd.s32 1, %s21
      %s31 = scalar_select %p28, %s30, %s21
      %p32 = scmp.ge.s32.totalorder %s31, 2
      %s33 = scalar_select %p32, 0, %s31
      %s34 = ssub.s32 %s21, %s33
      %s35 = ssub.s32 %s22, %s29
      %s36 = sor.u32 %s34, %s35
      %p37 = scmp.eq.s32.totalorder %s36, 0
      %s39 = sadd.s32 %s38, 1
      %s40 = scalar_select %p37, %s38, %s39
      %p43 = pneg %p37
      %p44 = scmp.eq.s32.totalorder %s14, 1
      %p45 = por %p43, %p44
      %p46 = scmp.ne.s32.totalorder %s38, %s41
      %p47 = scmp.eq.s32.totalorder %s14, 0
      %p48 = por %p46, %p47
      %p49 = scmp.ne.s32.totalorder %s38, %s41
      %p50 = scmp.eq.s32.totalorder %s19, 1
      %p51 = por %p49, %p50
      %p52 = scmp.ne.s32.totalorder %s41, %s42
      %p53 = scmp.eq.s32.totalorder %s19, 0
      %p54 = por %p52, %p53
      %p55 = scmp.ne.s32.totalorder %s41, %s42
      %p56 = scmp.eq.s32.totalorder %s20, 1
      %p57 = por %p55, %p56
      %p59 = scmp.ne.s32.totalorder %s42, %s58
      %p60 = scmp.eq.s32.totalorder %s20, 0
      %p61 = por %p59, %p60
      %s62 = ssub.s32 %s21, %s33
      %s63 = ssub.s32 %s22, %s29
      %s64 = sor.u32 %s62, %s63
      %p65 = scmp.eq.s32.totalorder %s64, 0
      %s67 = sadd.s32 %s66, 1
      %s68 = scalar_select %p65, %s66, %s67
      %p71 = pneg %p65
      %p72 = scmp.eq.s32.totalorder %s14, 1
      %p73 = por %p71, %p72
      %p74 = scmp.ne.s32.totalorder %s66, %s69
      %p75 = scmp.eq.s32.totalorder %s14, 0
      %p76 = por %p74, %p75
      %p77 = scmp.ne.s32.totalorder %s66, %s69
      %p78 = scmp.eq.s32.totalorder %s19, 1
      %p79 = por %p77, %p78
      %p80 = scmp.ne.s32.totalorder %s69, %s70
      %p81 = scmp.eq.s32.totalorder %s19, 0
      %p82 = por %p80, %p81
      %p83 = scmp.ne.s32.totalorder %s69, %s70
      %p84 = scmp.eq.s32.totalorder %s20, 1
      %p85 = por %p83, %p84
      %p87 = scmp.ne.s32.totalorder %s70, %s86
      %p88 = scmp.eq.s32.totalorder %s20, 0
      %p89 = por %p87, %p88
      %s91 = sadd.s32 %s90, 1
      %p94 = scmp.eq.s32.totalorder %s14, 1
      %p95 = scmp.ne.s32.totalorder %s90, %s92
      %p96 = scmp.eq.s32.totalorder %s14, 0
      %p97 = por %p95, %p96
      %p98 = scmp.ne.s32.totalorder %s90, %s92
      %p99 = scmp.eq.s32.totalorder %s19, 1
      %p100 = por %p98, %p99
      %p101 = scmp.ne.s32.totalorder %s92, %s93
      %p102 = scmp.eq.s32.totalorder %s19, 0
      %p103 = por %p101, %p102
      %p104 = scmp.ne.s32.totalorder %s92, %s93
      %p105 = scmp.eq.s32.totalorder %s20, 1
      %p106 = por %p104, %p105
      %p108 = scmp.ne.s32.totalorder %s93, %s107
      %p109 = scmp.eq.s32.totalorder %s20, 0
      %p110 = por %p108, %p109
      %s111 = ssub.s32 %s21, %s33
      %s112 = ssub.s32 %s22, %s29
      %s113 = sor.u32 %s111, %s112
      %p114 = scmp.eq.s32.totalorder %s113, 0
      %s116 = sadd.s32 %s115, 1
      %s117 = scalar_select %p114, %s115, %s116
      %p120 = pneg %p114
      %p121 = scmp.eq.s32.totalorder %s14, 1
      %p122 = por %p120, %p121
      %p123 = scmp.ne.s32.totalorder %s115, %s118
      %p124 = scmp.eq.s32.totalorder %s14, 0
      %p125 = por %p123, %p124
      %p126 = scmp.ne.s32.totalorder %s115, %s118
      %p127 = scmp.eq.s32.totalorder %s19, 1
      %p128 = por %p126, %p127
      %p129 = scmp.ne.s32.totalorder %s118, %s119
      %p130 = scmp.eq.s32.totalorder %s19, 0
      %p131 = por %p129, %p130
      %p132 = scmp.ne.s32.totalorder %s118, %s119
      %p133 = scmp.eq.s32.totalorder %s20, 1
      %p134 = por %p132, %p133
      %p136 = scmp.ne.s32.totalorder %s119, %s135
      %p137 = scmp.eq.s32.totalorder %s20, 0
      %p138 = por %p136, %p137
      %s139 = ssub.s32 %s21, %s33
      %s140 = ssub.s32 %s22, %s29
      %s141 = sor.u32 %s139, %s140
      %p142 = scmp.eq.s32.totalorder %s141, 0
      %s144 = sadd.s32 %s143, 1
      %s145 = scalar_select %p142, %s143, %s144
      %p148 = pneg %p142
      %p149 = scmp.eq.s32.totalorder %s14, 1
      %p150 = por %p148, %p149
      %p151 = scmp.ne.s32.totalorder %s143, %s146
      %p152 = scmp.eq.s32.totalorder %s14, 0
      %p153 = por %p151, %p152
      %p154 = scmp.ne.s32.totalorder %s143, %s146
      %p155 = scmp.eq.s32.totalorder %s19, 1
      %p156 = por %p154, %p155
      %p157 = scmp.ne.s32.totalorder %s146, %s147
      %p158 = scmp.eq.s32.totalorder %s19, 0
      %p159 = por %p157, %p158
      %p160 = scmp.ne.s32.totalorder %s146, %s147
      %p161 = scmp.eq.s32.totalorder %s20, 1
      %p162 = por %p160, %p161
      %p164 = scmp.ne.s32.totalorder %s147, %s163
      %p165 = scmp.eq.s32.totalorder %s20, 0
      %p166 = por %p164, %p165
      %p167 = scmp.le.s32.totalorder 1, %s14
      %p168 = scmp.lt.s32.totalorder %s14, 3
      %p169 = pnand %p167, %p168
      %p170 = pneg %p169
      // Predicated region
      $region9: #{tpu_custom_call.1} parent=5 // pred_check
        _
      $region10: #{tpu_custom_call.1} parent=5 // pred_check_branch
        %172 = sbr.rel (%p169) target = $region12
      $region11: #{tpu_custom_call.1} parent=5 // pred_region
        %s173 = ssub.s32 %s14, 1
        // Predicated region
        $region13: #{tpu_custom_call.1} parent=11 // pred_check
          %p174 = pneg %p103
        $region14: #{tpu_custom_call.1} parent=11 // pred_check_branch
          %176 = sbr.rel (%p174) target = $region16
        $region15: #{tpu_custom_call.1} parent=11 // pred_region
          _
        $region16: #{tpu_custom_call.1} parent=11 // pred_fallthru
          _
      $region12: #{tpu_custom_call.1} parent=5 // pred_fallthru
        _
      %p177 = scmp.lt.s32.totalorder %s14, 2
      // Predicated region
      $region17: #{tpu_custom_call.1} parent=5 // pred_check
        %p178 = pneg %p177
      $region18: #{tpu_custom_call.1} parent=5 // pred_check_branch
        %180 = sbr.rel (%p178) target = $region20
      $region19: #{tpu_custom_call.1} parent=5 // pred_region
        // Predicated region
        $region21: #{tpu_custom_call.1} parent=19 // pred_check
          %p181 = pneg %p48
        $region22: #{tpu_custom_call.1} parent=19 // pred_check_branch
          %183 = sbr.rel (%p181) target = $region24
        $region23: #{tpu_custom_call.1} parent=19 // pred_region
          %s184 = sand.u32 %s38, 1
          %s185 = scalar_lea.sflag [#allocation3], %s184
          %s186 = sand.u32 %s38, 1
          %s187 = smul.addr %s186, 8
          %s188 = scalar_lea.vmem [#allocation2], %s187
          %s189 = smul.u32 2, %s22
          %s191 = ssub.s32 128, 128
          %192 = vsyncadd %s185, %s191
          %s193 = smul.addr %s21, 2
          %s194 = sadd.s32 %s189, %s193
          %s195 = smul.addr %s194, 64
          %s196 = scalar_lea.hbm %s0, %s195
          %s198 = sshll.u32 %s188, 4
          %s199 = int_to_ptr.vmem [resolvable:$true] %s198
          %201 = dma.hbm_to_vmem [thread:$0]  %s196, 128, %s199, %s185
        $region24: #{tpu_custom_call.1} parent=19 // pred_fallthru
          _
        // Predicated region
        $region25: #{tpu_custom_call.1} parent=19 // pred_check
          %p202 = pneg %p76
        $region26: #{tpu_custom_call.1} parent=19 // pred_check_branch
          %204 = sbr.rel (%p202) target = $region28
        $region27: #{tpu_custom_call.1} parent=19 // pred_region
          %s205 = smul.u32 2, %s22
          %p206 = scmp.lt.s32.totalorder %s21, 1
          %s207 = scalar_select %p206, %s21, 1
          %p208 = scmp.lt.s32.totalorder %s205, 1
          %s209 = scalar_select %p208, %s205, 1
          %s210 = smul.addr %s207, 2
          %s211 = sadd.s32 %s209, %s210
          %s212 = scalar_lea.vmem %s1, %s211
          %s213 = smul.u32 2, %s22
        $region28: #{tpu_custom_call.1} parent=19 // pred_fallthru
          _
      $region20: #{tpu_custom_call.1} parent=5 // pred_fallthru
        _
      %p214 = scmp.le.s32.totalorder 1, %s14
      %p215 = scmp.lt.s32.totalorder %s14, 3
      %p216 = pnand %p214, %p215
      %p217 = pneg %p216
      // Predicated region
      $region29: #{tpu_custom_call.1} parent=5 // pred_check
        _
      $region30: #{tpu_custom_call.1} parent=5 // pred_check_branch
        %219 = sbr.rel (%p216) target = $region32
      $region31: #{tpu_custom_call.1} parent=5 // pred_region
        %s220 = ssub.s32 %s14, 1
        %s221 = sand.u32 %s41, 1
        %s222 = scalar_lea.sflag [#allocation3], %s221
        %s223 = sand.u32 %s41, 1
        %s224 = smul.addr %s223, 8
        %s225 = scalar_lea.vmem [#allocation2], %s224
        // Predicated region
        $region33: #{tpu_custom_call.1} parent=31 // pred_check
          %p226 = pneg %p54
        $region34: #{tpu_custom_call.1} parent=31 // pred_check_branch
          %228 = sbr.rel (%p226) target = $region36
        $region35: #{tpu_custom_call.1} parent=31 // pred_region
          %229 = dma.done %s222, 128
        $region36: #{tpu_custom_call.1} parent=31 // pred_fallthru
          _
        %s230 = sand.u32 %s41, 1
        %s231 = scalar_lea.sflag [#allocation3], %s230
        %s232 = sand.u32 %s41, 1
        %s233 = smul.addr %s232, 8
        %s234 = scalar_lea.vmem [#allocation2], %s233
        %p235 = pneg %p54
        %p236 = pneg %p51
        %s237 = smul.u32 2, %s24
        %p238 = scmp.lt.s32.totalorder %s23, 1
        %s239 = scalar_select %p238, %s23, 1
        %p240 = scmp.lt.s32.totalorder %s237, 1
        %s241 = scalar_select %p240, %s237, 1
        %s242 = smul.addr %s239, 2
        %s243 = sadd.s32 %s241, %s242
        %s244 = scalar_lea.vmem %s1, %s243
        %p245 = pneg %p82
        %p246 = pneg %p79
        %p247 = pneg %p103
        %p248 = pneg %p100
        %p249 = pneg %p131
        %p250 = pneg %p128
        %p251 = scmp.lt.s32.totalorder %s23, 1
        %s252 = scalar_select %p251, %s23, 1
        %p253 = scmp.lt.s32.totalorder %s24, 0
        %s254 = scalar_select %p253, %s24, 0
        %s255 = sadd.s32 %s254, %s252
        %s256 = scalar_lea.vmem %s3, %s255
        %p257 = pneg %p159
        %p258 = pneg %p156
        %p259 = scmp.lt.s32.totalorder %s23, 1
        %s260 = scalar_select %p259, %s23, 1
        %p261 = scmp.lt.s32.totalorder %s24, 0
        %s262 = scalar_select %p261, %s24, 0
        %s263 = sadd.s32 %s262, %s260
        %s264 = scalar_lea.vmem %s4, %s263
        %s265 = smul.u32 2, %s24
        %s266 = smul.u32 2, %s24
        %p267 = scmp.lt.s32.totalorder %s23, 1
        %s268 = scalar_select %p267, %s23, 1
        %p269 = scmp.lt.s32.totalorder %s266, 1
        %s270 = scalar_select %p269, %s266, 1
        %s271 = smul.addr %s268, 2
        %s272 = sadd.s32 %s270, %s271
        %s273 = scalar_lea.vmem %s1, %s272
        %s274 = smul.u32 2, %s24
        %p275 = scmp.lt.s32.totalorder %s23, 1
        %s276 = scalar_select %p275, %s23, 1
        %p277 = scmp.lt.s32.totalorder %s24, 0
        %s278 = scalar_select %p277, %s24, 0
        %s279 = sadd.s32 %s278, %s276
        %s280 = scalar_lea.vmem %s3, %s279
        %p281 = scmp.lt.s32.totalorder %s23, 1
        %s282 = scalar_select %p281, %s23, 1
        %p283 = scmp.lt.s32.totalorder %s24, 0
        %s284 = scalar_select %p283, %s24, 0
        %s285 = sadd.s32 %s284, %s282
        %s286 = scalar_lea.vmem %s4, %s285
        %v287 = vld [vmem:[%s225] sm:$0xff]
        %v289 = vcombine.high %v287, %v287
        %vm291 = vcmask 1043456
        %v292 = vsel %vm291, %v287, -inf
        %v293 = vrot.slane %v292, 4
        %v294 = vmax.f32 %v292, %v293
        %v295 = vrot.slane %v294, 2
        %v296 = vmax.f32 %v294, %v295
        %v297 = vrot.slane %v296, 1
        %v298 = vmax.f32 %v296, %v297
        %v299 = vsel %vm291, %v289, -inf
        %v300 = vrot.slane %v299, 4
        %v301 = vmax.f32 %v299, %v300
        %v302 = vrot.slane %v301, 2
        %v303 = vmax.f32 %v301, %v302
        %v304 = vrot.slane %v303, 1
        %v305 = vmax.f32 %v303, %v304
        %v308 = vcombine.low %v298, %v305
        %v310 = vsub.f32 %v287, %v308
        %v311 = vmul.f32 %v310, 1.442695
        %v312 = vpow.pop %v311
        %v314 = vcombine.high %v312, %v312
        %v316 = vsel %vm291, %v312, 0.0
        %v317 = vrot.slane %v316, 4
        %v318 = vadd.f32 %v316, %v317
        %v319 = vrot.slane %v318, 2
        %v320 = vadd.f32 %v318, %v319
        %v321 = vrot.slane %v320, 1
        %v322 = vadd.f32 %v320, %v321
        %v323 = vsel %vm291, %v314, 0.0
        %v324 = vrot.slane %v323, 4
        %v325 = vadd.f32 %v323, %v324
        %v326 = vrot.slane %v325, 2
        %v327 = vadd.f32 %v325, %v326
        %v328 = vrot.slane %v327, 1
        %v329 = vadd.f32 %v327, %v328
        %v330 = vlog2.pop %v322
        %v331 = vmul.f32 %v330, 0.6931472
        %v332 = vlog2.pop %v329
        %v333 = vmul.f32 %v332, 0.6931472
        %v334 = vld [vmem:[%s273] sm:$0x3]
        %v335 = vunpack.c.0.s8 %v334
        %v336 = vlaneseq
        %v337 = vshrl.u32 %v336, 7
        %v338 = vlaneseq
        %v339 = vshrl.u32 %v338, 7
        %v340 = vsub.s32 0, %v339
        %v341 = vrot.slane %v335, %v340
        %v342 = vlaneseq
        %v343 = vshrl.u32 %v342, 7
        %v344 = vsub.s32 4, %v343
        %v345 = vrot.slane %v335, %v344
        %v346 = vlaneseq
        %v347 = vshrl.u32 %v346, 7
        %v348 = vsub.s32 0, %v347
        %v349 = vrot.slane %v341, %v348
        %v350 = vlaneseq
        %v351 = vshrl.u32 %v350, 7
        %v352 = vsub.s32 0, %v351
        %v353 = vrot.slane %v345, %v352
        %vm354 = vcmp.eq.s32.totalorder %v337, %v349
        %vm355 = vcmp.eq.s32.totalorder %v337, %v353
        %v357 = vcombine.high %v310, %v310
        %v359 = vsel %vm354, %v310, 0.0
        %v360 = vsel %vm355, %v357, 0.0
        %v361 = vsel %vm291, %v359, 0.0
        %v362 = vrot.slane %v361, 4
        %v363 = vadd.f32 %v361, %v362
        %v364 = vrot.slane %v363, 2
        %v365 = vadd.f32 %v363, %v364
        %v366 = vrot.slane %v365, 1
        %v367 = vadd.f32 %v365, %v366
        %v368 = vsel %vm291, %v360, 0.0
        %v369 = vrot.slane %v368, 4
        %v370 = vadd.f32 %v368, %v369
        %v371 = vrot.slane %v370, 2
        %v372 = vadd.f32 %v370, %v371
        %v373 = vrot.slane %v372, 1
        %v374 = vadd.f32 %v372, %v373
        %v375 = vsub.f32 %v367, %v331
        %v376 = vsub.f32 %v374, %v333
        %v377 = vmul.f32 %v375, 1.442695
        %v378 = vpow.pop %v377
        %v379 = vmul.f32 %v376, 1.442695
        %v380 = vpow.pop %v379
        %v381 = vsub.f32 1.0, %v378
        %v382 = vsub.f32 1.0, %v380
        %v383 = vmul.f32 %v381, %v381
        %v384 = vmul.f32 %v382, %v382
        %v385 = vld [vmem:[%s2] sm:$0xf]
        %387 = vset.pattern.permute.xlu0 0
        %388 = vperm.xlu0 %387, %v385
        %v389 = vpop.permute.xlu0 %388
        %v391 = vsel %vm354, %v389, 0.0
        %v392 = vsel %vm355, %v389, 0.0
        %v393 = vsel %vm291, %v391, 0.0
        %v394 = vrot.slane %v393, 4
        %v395 = vadd.f32 %v393, %v394
        %v396 = vrot.slane %v395, 2
        %v397 = vadd.f32 %v395, %v396
        %v398 = vrot.slane %v397, 1
        %v399 = vadd.f32 %v397, %v398
        %v400 = vsel %vm291, %v392, 0.0
        %v401 = vrot.slane %v400, 4
        %v402 = vadd.f32 %v400, %v401
        %v403 = vrot.slane %v402, 2
        %v404 = vadd.f32 %v402, %v403
        %v405 = vrot.slane %v404, 1
        %v406 = vadd.f32 %v404, %v405
        %v407 = vmul.f32 %v383, %v399
        %v408 = vmul.f32 %v384, %v406
        %v409 = vmul.f32 %v407, %v375
        %v410 = vmul.f32 %v408, %v376
        %vm411 = vcmask 1040384
        %v412 = vsel %vm411, %v409, 0.0
        %v413 = vsel %vm411, %v410, 0.0
        %v414 = vadd.f32 %v412, %v413
        %415 = vadd.xlane.f32.xlu0 %v414
        %v416 = vpop.xlane.xlu0 %415
        %v417 = vrot.slane %v416, 4
        %v418 = vadd.f32 %v416, %v417
        %v419 = vrot.slane %v418, 2
        %v420 = vadd.f32 %v418, %v419
        %v421 = vrot.slane %v420, 1
        %v422 = vadd.f32 %v420, %v421
        %s423 = vtos %v422
        %v424 = vstv %s423
        %vm425 = vcmask 0
        %426 = vst.msk [vmem:[%s280] sm:$0x1] %vm425, %v424
        %v427 = vsel %vm411, %v383, 0.0
        %v428 = vsel %vm411, %v384, 0.0
        %v429 = vadd.f32 %v427, %v428
        %430 = vadd.xlane.f32.xlu0 %v429
        %v431 = vpop.xlane.xlu0 %430
        %v432 = vrot.slane %v431, 4
        %v433 = vadd.f32 %v431, %v432
        %v434 = vrot.slane %v433, 2
        %v435 = vadd.f32 %v433, %v434
        %v436 = vrot.slane %v435, 1
        %v437 = vadd.f32 %v435, %v436
        %s438 = vtos %v437
        %v439 = vstv %s438
        %440 = vst.msk [vmem:[%s286] sm:$0x1] %vm425, %v439
        %p441 = scmp.lt.s32.totalorder %s23, 1
        %s442 = scalar_select %p441, %s23, 1
        %p443 = scmp.lt.s32.totalorder %s24, 0
        %s444 = scalar_select %p443, %s24, 0
        %s445 = sadd.s32 %s444, %s442
        %s446 = scalar_lea.vmem %s3, %s445
        %p447 = scmp.lt.s32.totalorder %s23, 1
        %s448 = scalar_select %p447, %s23, 1
        %p449 = scmp.lt.s32.totalorder %s24, 0
        %s450 = scalar_select %p449, %s24, 0
        %s451 = sadd.s32 %s450, %s448
        %s452 = scalar_lea.vmem %s4, %s451
        // Predicated region
        $region37: #{tpu_custom_call.1} parent=31 // pred_check
          %p453 = pneg %p128
        $region38: #{tpu_custom_call.1} parent=31 // pred_check_branch
          %455 = sbr.rel (%p453) target = $region40
        $region39: #{tpu_custom_call.1} parent=31 // pred_region
          _
        $region40: #{tpu_custom_call.1} parent=31 // pred_fallthru
          _
        // Predicated region
        $region41: #{tpu_custom_call.1} parent=31 // pred_check
          %p456 = pneg %p156
        $region42: #{tpu_custom_call.1} parent=31 // pred_check_branch
          %458 = sbr.rel (%p456) target = $region44
        $region43: #{tpu_custom_call.1} parent=31 // pred_region
          _
        $region44: #{tpu_custom_call.1} parent=31 // pred_fallthru
          _
      $region32: #{tpu_custom_call.1} parent=5 // pred_fallthru
        _
      %p459 = scmp.le.s32.totalorder 2, %s14
      // Predicated region
      $region45: #{tpu_custom_call.1} parent=5 // pred_check
        %p460 = pneg %p459
      $region46: #{tpu_custom_call.1} parent=5 // pred_check_branch
        %462 = sbr.rel (%p460) target = $region48
      $region47: #{tpu_custom_call.1} parent=5 // pred_region
        %s463 = ssub.s32 %s14, 2
        // Predicated region
        $region49: #{tpu_custom_call.1} parent=47 // pred_check
          %p464 = pneg %p134
        $region50: #{tpu_custom_call.1} parent=47 // pred_check_branch
          %466 = sbr.rel (%p464) target = $region52
        $region51: #{tpu_custom_call.1} parent=47 // pred_region
          %p467 = scmp.lt.s32.totalorder %s25, 1
          %s468 = scalar_select %p467, %s25, 1
          %p469 = scmp.lt.s32.totalorder %s26, 0
          %s470 = scalar_select %p469, %s26, 0
          %s471 = sadd.s32 %s470, %s468
          %s472 = scalar_lea.vmem %s3, %s471
        $region52: #{tpu_custom_call.1} parent=47 // pred_fallthru
          _
        // Predicated region
        $region53: #{tpu_custom_call.1} parent=47 // pred_check
          %p473 = pneg %p162
        $region54: #{tpu_custom_call.1} parent=47 // pred_check_branch
          %475 = sbr.rel (%p473) target = $region56
        $region55: #{tpu_custom_call.1} parent=47 // pred_region
          %p476 = scmp.lt.s32.totalorder %s25, 1
          %s477 = scalar_select %p476, %s25, 1
          %p478 = scmp.lt.s32.totalorder %s26, 0
          %s479 = scalar_select %p478, %s26, 0
          %s480 = sadd.s32 %s479, %s477
          %s481 = scalar_lea.vmem %s4, %s480
        $region56: #{tpu_custom_call.1} parent=47 // pred_fallthru
          _
      $region48: #{tpu_custom_call.1} parent=5 // pred_fallthru
        _
    $region6: #{tpu_custom_call.1} parent=1 // loop_footer
      %s18 = sadd.s32 1, %s14
    $region7: #{tpu_custom_call.1} parent=1 // loop_footer_branch
      %13 = sbr.rel target = $region3
    $region8: #{tpu_custom_call.1} parent=1 // loop_exit
      _
    %482 = vsyncpa [#allocation3], 1
    %s483 = scalar_lea.sflag [#allocation3], 1
    %484 = vsyncpa %s483, 1

</llo_original>
